<compile_context>
chip_gen: v6e
topology: v6e:2x2x1
jax: 0.10.0
libtpu: 0.0.40
codegen_flags: <defaults>
</compile_context>

<pallas_src>
import functools
import math

import jax
import jax.numpy as jnp
from jax.experimental import pallas as pl
from jax.experimental.pallas import tpu as pltpu


# ----------------------------- small helpers --------------------------------

def _silu(v):
    return v * jax.nn.sigmoid(v)


@functools.lru_cache(maxsize=None)
def _vmem_limit_bytes():
    # 48 MiB on v7x (64 MiB physical), 96 MiB on v5e/v6e (128 MiB physical).
    cap = 64 * 1024 * 1024  # conservative fallback
    try:
        cap = int(getattr(pltpu.get_tpu_info(), "vmem_capacity_bytes", cap))
    except Exception:
        pass
    return (cap * 3) // 4


def _pick_cout_tile(cout):
    for t in (256, 128):
        if cout % t == 0:
            return t
    # TODO(synk): pad cout up to a multiple of 128 instead of emitting a
    # sub-128 MXU M-tile for small channel counts.
    return cout


def _stack_taps(x, H, W):
    """x: (Cin, H*W).  Returns the (9*Cin, H*W) stacked/shifted conv operand.

    Stack order is t = (oy+1)*3 + (ox+1) (= ky*3 + kx), matching
    pack_conv3x3_weight_k.  Row shifts (+-W) are computed once (with their row
    masks) and shared by the three column taps derived from them; the column
    masks applied afterwards keep the result exact at row boundaries.
    """
    cin, hw = x.shape
    p = jax.lax.broadcasted_iota(jnp.int32, (1, hw), 1)
    if (W & (W - 1)) == 0:
        xcol = jnp.bitwise_and(p, W - 1)
    else:
        xcol = jax.lax.rem(p, W)
    row_ok = {-1: p >= W, 1: p < (H - 1) * W}
    col_ok = {-1: xcol >= 1, 1: xcol <= W - 2}

    pieces = []
    for oy in (-1, 0, 1):
        xr = x if oy == 0 else jnp.roll(x, -oy * W, axis=1)
        if oy != 0:
            xr = jnp.where(row_ok[oy], xr, 0)
        for ox in (-1, 0, 1):
            xc = xr if ox == 0 else jnp.roll(xr, -ox, axis=1)
            if ox != 0:
                xc = jnp.where(col_ok[ox], xc, 0)
            pieces.append(xc)
    return jnp.concatenate(pieces, axis=0)


# ----------------------------- Pallas kernels -------------------------------

def conv3x3_kernel(x_ref, w_ref, b_ref, o_ref, xs_ref, *, H, W, apply_act):
    # Rebuild the stacked operand only when the batch index changes; it is
    # shared by every cout tile of this batch element (j axis is "arbitrary",
    # so megacore never splits it).
    @pl.when(pl.program_id(1) == 0)
    def _():
        xs_ref[...] = _stack_taps(x_ref[0], H, W)

    acc = jnp.dot(w_ref[...], xs_ref[...], preferred_element_type=jnp.float32)
    acc = acc + b_ref[0].astype(jnp.float32)          # (tco, 1) broadcast over lanes
    if apply_act:
        acc = _silu(acc)
    o_ref[0] = acc.astype(o_ref.dtype)


def conv3x3_res_kernel(x_ref, w_ref, b_ref, skip_ref, o_ref, xs_ref, *, H, W, out_scale):
    @pl.when(pl.program_id(1) == 0)
    def _():
        xs_ref[...] = _stack_taps(x_ref[0], H, W)

    acc = jnp.dot(w_ref[...], xs_ref[...], preferred_element_type=jnp.float32)
    acc = acc + b_ref[0].astype(jnp.float32)
    acc = (acc + skip_ref[0].astype(jnp.float32)) * out_scale
    o_ref[0] = acc.astype(o_ref.dtype)


def spade_norm_act_kernel(x_ref, a_ref, w_ref, bb_ref, o_ref, *, H, W, num_groups, eps):
    """Fused GroupNorm(affine=False) + in-kernel gamma/beta 3x3 conv + SPADE
    modulation + SiLU.  x_ref: (1, C, HW); a_ref: (1, S, HW) (shared SPADE
    activation); w_ref: (2C, 9S); bb_ref: (2C, 1)."""
    x = x_ref[0].astype(jnp.float32)                   # (C, HW)
    C, HW = x.shape

    # ---- gamma/beta conv as one deep-K matmul (never leaves VMEM) ----
    xs = _stack_taps(a_ref[0], H, W)                   # (9S, HW)
    gb = jnp.dot(w_ref[...], xs, preferred_element_type=jnp.float32)
    gb = gb + bb_ref[...].astype(jnp.float32)          # (2C, HW)
    gamma = gb[:C]
    beta = gb[C:]

    # ---- GroupNorm stats: reduce over HW first, then tiny group matmuls ----
    cg = C // num_groups
    g_ids = jax.lax.broadcasted_iota(jnp.int32, (num_groups, C), 0)
    c_ids = jax.lax.broadcasted_iota(jnp.int32, (num_groups, C), 1)
    M = jnp.logical_and(c_ids >= g_ids * cg, c_ids < (g_ids + 1) * cg).astype(jnp.float32)
    c_ids_t = jax.lax.broadcasted_iota(jnp.int32, (C, num_groups), 0)
    g_ids_t = jax.lax.broadcasted_iota(jnp.int32, (C, num_groups), 1)
    MT = jnp.logical_and(c_ids_t >= g_ids_t * cg, c_ids_t < (g_ids_t + 1) * cg).astype(jnp.float32)

    inv_n = 1.0 / float(cg * HW)
    sum_c = jnp.sum(x, axis=1, keepdims=True)                                 # (C, 1)
    mean_g = jnp.dot(M, sum_c, preferred_element_type=jnp.float32) * inv_n    # (G, 1)
    mean_c = jnp.dot(MT, mean_g, preferred_element_type=jnp.float32)          # (C, 1)
    d = x - mean_c
    ssq_c = jnp.sum(d * d, axis=1, keepdims=True)                             # (C, 1)
    var_g = jnp.dot(M, ssq_c, preferred_element_type=jnp.float32) * inv_n     # (G, 1)
    var_c = jnp.dot(MT, var_g, preferred_element_type=jnp.float32)            # (C, 1)
    xn = d * jax.lax.rsqrt(var_c + eps)

    y = xn * (1.0 + gamma) + beta
    o_ref[0] = _silu(y).astype(o_ref.dtype)


def nin_kernel(x_ref, w_ref, b_ref, o_ref):
    acc = jnp.dot(w_ref[...], x_ref[0], preferred_element_type=jnp.float32)
    o_ref[0] = (acc + b_ref[...].astype(jnp.float32)).astype(o_ref.dtype)


def temb_dense_kernel(t_ref, w_ref, b_ref, o_ref):
    t = _silu(t_ref[...].astype(jnp.float32))
    y = jnp.dot(t, w_ref[...], preferred_element_type=jnp.float32)
    o_ref[...] = (y + b_ref[...].astype(jnp.float32)).astype(o_ref.dtype)


# ------------------------------ wrappers -------------------------------------

def pallas_conv3x3(x2d, w_k, bias_bco1, H, W, *, apply_act=False, skip=None, out_scale=1.0):
    """x2d: (B, Cin, H*W); w_k: (Cout, 9*Cin); bias_bco1: (B, Cout, 1) f32."""
    B, cin, HW = x2d.shape
    assert HW == H * W
    cout = w_k.shape[0]
    tco = _pick_cout_tile(cout)
    n_co = cout // tco
    esize = jnp.dtype(x2d.dtype).itemsize

    in_specs = [
        pl.BlockSpec((1, cin, HW), lambda b, j: (b, 0, 0)),
        pl.BlockSpec((tco, 9 * cin), lambda b, j: (j, 0)),
        pl.BlockSpec((1, tco, 1), lambda b, j: (b, j, 0)),
    ]
    args = [x2d, w_k, bias_bco1]
    if skip is None:
        kern = functools.partial(conv3x3_kernel, H=H, W=W, apply_act=apply_act)
    else:
        in_specs.append(pl.BlockSpec((1, tco, HW), lambda b, j: (b, j, 0)))
        args.append(skip)
        kern = functools.partial(conv3x3_res_kernel, H=H, W=W, out_scale=out_scale)

    bytes_acc = esize * (B * cin * HW + cout * 9 * cin
                         + B * cout * HW * (2 if skip is not None else 1)) + 4 * B * cout
    # TODO(synk): add a spatial (HW) grid axis with +-W halo handling for
    # high-resolution inputs (needed to fit v7x's 64 MiB VMEM at HW >= 16k) and
    # optionally swap grid order to (n_co, B) when the weight tile is larger
    # than the activation tile.
    return pl.pallas_call(
        kern,
        out_shape=jax.ShapeDtypeStruct((B, cout, HW), x2d.dtype),
        grid_spec=pltpu.PrefetchScalarGridSpec(
            num_scalar_prefetch=0,
            grid=(B, n_co),
            in_specs=in_specs,
            out_specs=pl.BlockSpec((1, tco, HW), lambda b, j: (b, j, 0)),
            scratch_shapes=[pltpu.VMEM((9 * cin, HW), x2d.dtype)],
        ),
        compiler_params=pltpu.CompilerParams(
            dimension_semantics=("parallel", "arbitrary"),
            vmem_limit_bytes=_vmem_limit_bytes()),
        cost_estimate=pl.CostEstimate(
            flops=2 * B * cout * 9 * cin * HW,
            transcendentals=(B * cout * HW if apply_act else 0),
            bytes_accessed=bytes_acc),
    )(*args)


def pallas_spade_norm_act(x2d, actv_all, a_index, spade_dim, w_gb_k, b_gb_col,
                          H, W, num_groups, eps=1e-6):
    """x2d: (B, C, HW); actv_all: (B, n*spade_dim, HW) (a_index selects the
    spade_dim-sized channel block); w_gb_k: (2C, 9*spade_dim); b_gb_col: (2C, 1)."""
    B, C, HW = x2d.shape
    S = spade_dim
    esize = jnp.dtype(x2d.dtype).itemsize
    # TODO(synk): for large HW, tile the spatial axis (two-phase: accumulate
    # per-channel sum/sumsq across an 'arbitrary' HW axis, then apply) so the
    # working set fits v7x's 64 MiB VMEM and both TensorCores get work at small B.
    return pl.pallas_call(
        functools.partial(spade_norm_act_kernel, H=H, W=W, num_groups=num_groups, eps=eps),
        out_shape=jax.ShapeDtypeStruct((B, C, HW), x2d.dtype),
        grid_spec=pltpu.PrefetchScalarGridSpec(
            num_scalar_prefetch=0,
            grid=(B,),
            in_specs=[
                pl.BlockSpec((1, C, HW), lambda b: (b, 0, 0)),
                pl.BlockSpec((1, S, HW), lambda b: (b, a_index, 0)),
                pl.BlockSpec((2 * C, 9 * S), lambda b: (0, 0)),
                pl.BlockSpec((2 * C, 1), lambda b: (0, 0)),
            ],
            out_specs=pl.BlockSpec((1, C, HW), lambda b: (b, 0, 0)),
        ),
        compiler_params=pltpu.CompilerParams(
            dimension_semantics=("parallel",),
            vmem_limit_bytes=_vmem_limit_bytes()),
        cost_estimate=pl.CostEstimate(
            flops=2 * B * (2 * C) * (9 * S) * HW + 10 * B * C * HW,
            transcendentals=2 * B * C * HW,
            bytes_accessed=esize * (2 * B * C * HW + B * S * HW) + 4 * (2 * C * 9 * S + 2 * C)),
    )(x2d, actv_all, w_gb_k, b_gb_col)


def pallas_nin(x2d, w, b_col):
    """x2d: (B, Cin, HW); w: (Cout, Cin); b_col: (Cout, 1)."""
    B, cin, HW = x2d.shape
    cout = w.shape[0]
    tco = _pick_cout_tile(cout)
    n_co = cout // tco
    esize = jnp.dtype(x2d.dtype).itemsize
    return pl.pallas_call(
        nin_kernel,
        out_shape=jax.ShapeDtypeStruct((B, cout, HW), x2d.dtype),
        grid_spec=pltpu.PrefetchScalarGridSpec(
            num_scalar_prefetch=0,
            grid=(B, n_co),
            in_specs=[pl.BlockSpec((1, cin, HW), lambda b, j: (b, 0, 0)),
                      pl.BlockSpec((tco, cin), lambda b, j: (j, 0)),
                      pl.BlockSpec((tco, 1), lambda b, j: (j, 0))],
            out_specs=pl.BlockSpec((1, tco, HW), lambda b, j: (b, j, 0)),
        ),
        compiler_params=pltpu.CompilerParams(
            dimension_semantics=("parallel", "parallel"),
            vmem_limit_bytes=_vmem_limit_bytes()),
        cost_estimate=pl.CostEstimate(
            flops=2 * B * cout * cin * HW,
            transcendentals=0,
            bytes_accessed=esize * (B * cin * HW + cout * cin + B * cout * HW) + 4 * cout),
    )(x2d, w, b_col)


def pallas_temb_dense(temb, w, b):
    """temb: (B, D); w: (D, Dout); b: (Dout,)  ->  SiLU(temb) @ w + b."""
    B, _ = temb.shape
    Dout = w.shape[1]
    return pl.pallas_call(
        temb_dense_kernel,
        out_shape=jax.ShapeDtypeStruct((B, Dout), temb.dtype),
    )(temb, w, b.reshape(1, Dout))


# --------------------------- plain-JAX helpers ------------------------------

def nearest_resize(seg, H, W):
    # TODO(synk): nearest-neighbour interpolation is a pure index gather; done
    # in plain JAX (identity when the conditioning map already matches x).
    B, C, Hs, Ws = seg.shape
    if (Hs, Ws) == (H, W):
        return seg
    rows = (jnp.arange(H) * Hs) // H
    cols = (jnp.arange(W) * Ws) // W
    return seg[:, :, rows[:, None], cols[None, :]]


def pack_conv3x3_weight_k(w):
    # (Cout, Cin, 3, 3) -> (Cout, 9*Cin), K index = (ky*3+kx)*Cin + c,
    # matching the _stack_taps operand order.
    cout, cin = w.shape[0], w.shape[1]
    return jnp.transpose(w, (0, 2, 3, 1)).reshape(cout, 9 * cin)


def _num_groups(c):
    ng = min(c // 4, 32)
    while c % ng != 0:
        ng -= 1
    return ng


# ------------------------------- module -------------------------------------

class ResnetBlockDDPMppSPADEPallas:
    """Forward-pass port of ResnetBlockDDPMppSPADE (2-D, eval mode, act=SiLU)."""

    def __init__(self, in_ch, out_ch=None, cond_ch=16, temb_dim=None,
                 spade_dim=128, skip_rescale=True, compute_dtype=jnp.float32, key=None):
        out_ch = out_ch or in_ch
        self.in_ch, self.out_ch = in_ch, out_ch
        self.cond_ch = cond_ch
        self.spade_dim = spade_dim
        self.skip_rescale = skip_rescale
        self.temb_dim = temb_dim
        self.compute_dtype = compute_dtype
        self.ng0 = _num_groups(in_ch)
        self.ng1 = _num_groups(out_ch)

        key = jax.random.PRNGKey(42) if key is None else key
        ks = jax.random.split(key, 20)

        def conv_init(k, cout, cin):
            return jax.random.normal(k, (cout, cin, 3, 3), jnp.float32) / math.sqrt(9 * cin)

        def bias_init(k, n):
            return 0.1 * jax.random.normal(k, (n,), jnp.float32)

        # SPADE 0 (norm_nc = in_ch)
        self.w_sh0 = conv_init(ks[0], spade_dim, cond_ch); self.b_sh0 = bias_init(ks[1], spade_dim)
        self.w_g0 = conv_init(ks[2], in_ch, spade_dim);    self.b_g0 = bias_init(ks[3], in_ch)
        self.w_b0 = conv_init(ks[4], in_ch, spade_dim);    self.b_b0 = bias_init(ks[5], in_ch)
        # Conv_0
        self.w_conv0 = conv_init(ks[6], out_ch, in_ch);    self.b_conv0 = bias_init(ks[7], out_ch)
        # Dense_0 (time embedding)
        if temb_dim is not None:
            self.w_temb = jax.random.normal(ks[8], (temb_dim, out_ch), jnp.float32) / math.sqrt(temb_dim)
            self.b_temb = jnp.zeros((out_ch,), jnp.float32)
        # SPADE 1 (norm_nc = out_ch)
        self.w_sh1 = conv_init(ks[9], spade_dim, cond_ch); self.b_sh1 = bias_init(ks[10], spade_dim)
        self.w_g1 = conv_init(ks[11], out_ch, spade_dim);  self.b_g1 = bias_init(ks[12], out_ch)
        self.w_b1 = conv_init(ks[13], out_ch, spade_dim);  self.b_b1 = bias_init(ks[14], out_ch)
        # Conv_1
        self.w_conv1 = conv_init(ks[15], out_ch, out_ch);  self.b_conv1 = bias_init(ks[16], out_ch)
        # NIN skip (only if channel count changes).  TODO(synk): conv_shortcut=True
        # (3x3 shortcut) and is3d/pseudo3d conv variants are not implemented.
        if in_ch != out_ch:
            self.w_nin = jax.random.normal(ks[17], (out_ch, in_ch), jnp.float32) / math.sqrt(in_ch)
            self.b_nin = bias_init(ks[18], out_ch)

        # ---- packed kernel-side weights ----
        cdt = compute_dtype
        # the two mlp_shared convs merged into one (2*spade_dim output channels)
        self.wp_sh = pack_conv3x3_weight_k(
            jnp.concatenate([self.w_sh0, self.w_sh1], axis=0)).astype(cdt)
        self.b_sh = jnp.concatenate([self.b_sh0, self.b_sh1], axis=0)
        # gamma & beta convs fused into one weight per SPADE block (used in-kernel)
        self.wp_gb0 = pack_conv3x3_weight_k(
            jnp.concatenate([self.w_g0, self.w_b0], axis=0)).astype(cdt)
        self.b_gb0_col = jnp.concatenate([self.b_g0, self.b_b0], axis=0)[:, None]
        self.wp_gb1 = pack_conv3x3_weight_k(
            jnp.concatenate([self.w_g1, self.w_b1], axis=0)).astype(cdt)
        self.b_gb1_col = jnp.concatenate([self.b_g1, self.b_b1], axis=0)[:, None]
        self.wp_conv0 = pack_conv3x3_weight_k(self.w_conv0).astype(cdt)
        self.wp_conv1 = pack_conv3x3_weight_k(self.w_conv1).astype(cdt)
        if in_ch != out_ch:
            self.w_nin_c = self.w_nin.astype(cdt)
            self.b_nin_col = self.b_nin[:, None]

    @staticmethod
    def _bias(b, B):
        return jnp.broadcast_to(b[None, :], (B, b.shape[0]))[:, :, None]

    def __call__(self, x, temb=None, cond=None):
        B, C, H, W = x.shape
        assert C == self.in_ch
        HW = H * W
        cdt = self.compute_dtype

        seg = nearest_resize(cond, H, W).reshape(B, self.cond_ch, HW).astype(cdt)
        x2d = x.reshape(B, C, HW).astype(cdt)

        # ---- shared SPADE conv (both blocks in one call) + SiLU ----
        actv_all = pallas_conv3x3(seg, self.wp_sh, self._bias(self.b_sh, B), H, W,
                                  apply_act=True)                      # (B, 2S, HW)

        # ---- SPADE 0: GroupNorm + in-kernel gamma/beta conv + modulate + act ----
        h = pallas_spade_norm_act(x2d, actv_all, 0, self.spade_dim,
                                  self.wp_gb0, self.b_gb0_col, H, W, self.ng0)

        # ---- Conv_0 (time-embedding projection folded into its bias) ----
        if temb is not None:
            tproj = pallas_temb_dense(temb, self.w_temb, self.b_temb)  # (B, out_ch)
            bias0 = (self.b_conv0[None, :] + tproj)[:, :, None]
        else:
            bias0 = self._bias(self.b_conv0, B)
        h = pallas_conv3x3(h, self.wp_conv0, bias0, H, W)

        # ---- SPADE 1 + act ----
        h = pallas_spade_norm_act(h, actv_all, 1, self.spade_dim,
                                  self.wp_gb1, self.b_gb1_col, H, W, self.ng1)
        # TODO(synk): Dropout_0 is identity in eval mode (no in-kernel dropout RNG).

        # ---- skip path ----
        if self.in_ch != self.out_ch:
            skip = pallas_nin(x2d, self.w_nin_c, self.b_nin_col)
        else:
            skip = x2d

        # ---- Conv_1 with fused residual add (+ optional 1/sqrt(2)) ----
        scale = (1.0 / math.sqrt(2.0)) if self.skip_rescale else 1.0
        out = pallas_conv3x3(h, self.wp_conv1, self._bias(self.b_conv1, B), H, W,
                             skip=skip, out_scale=scale)
        return out.reshape(B, self.out_ch, H, W)


# ------------------------------ reference -----------------------------------

def reference_forward(mod, x, temb, cond):
    act = lambda v: v * jax.nn.sigmoid(v)
    P = jax.lax.Precision.HIGHEST

    def conv3x3(v, w, b):
        y = jax.lax.conv_general_dilated(
            v, w, window_strides=(1, 1), padding=((1, 1), (1, 1)),
            dimension_numbers=("NCHW", "OIHW", "NCHW"), precision=P)
        return y + b[None, :, None, None]

    def gn(v, G, eps=1e-6):
        B, C, H, W = v.shape
        vg = v.reshape(B, G, C // G, H, W)
        m = vg.mean(axis=(2, 3, 4), keepdims=True)
        var = jnp.mean(jnp.square(vg - m), axis=(2, 3, 4), keepdims=True)
        return ((vg - m) * jax.lax.rsqrt(var + eps)).reshape(B, C, H, W)

    def spade(v, seg, w_sh, b_sh, w_g, b_g, w_b, b_b, G):
        n = gn(v, G)
        a = act(conv3x3(seg, w_sh, b_sh))
        gamma = conv3x3(a, w_g, b_g)
        beta = conv3x3(a, w_b, b_b)
        return n * (1.0 + gamma) + beta

    B, C, H, W = x.shape
    seg = nearest_resize(cond, H, W)

    h = act(spade(x, seg, mod.w_sh0, mod.b_sh0, mod.w_g0, mod.b_g0,
                  mod.w_b0, mod.b_b0, mod.ng0))
    h = conv3x3(h, mod.w_conv0, mod.b_conv0)
    if temb is not None:
        tp = jnp.dot(act(temb), mod.w_temb, precision=P) + mod.b_temb
        h = h + tp[:, :, None, None]
    h = act(spade(h, seg, mod.w_sh1, mod.b_sh1, mod.w_g1, mod.b_g1,
                  mod.w_b1, mod.b_b1, mod.ng1))
    h = conv3x3(h, mod.w_conv1, mod.b_conv1)
    if C != mod.out_ch:
        skip = jnp.einsum("bchw,oc->bohw", x, mod.w_nin, precision=P) \
            + mod.b_nin[None, :, None, None]
    else:
        skip = x
    out = skip + h
    if mod.skip_rescale:
        out = out / math.sqrt(2.0)
    return out


# -------------------------------- main ---------------------------------------

if __name__ == "__main__":
    key = jax.random.PRNGKey(0)
    kx, kt, kc, kp = jax.random.split(key, 4)

    B, in_ch, out_ch, cond_ch = 2, 32, 64, 16
    H = W = 16
    temb_dim, spade_dim = 32, 32

    x = jax.random.normal(kx, (B, in_ch, H, W), jnp.float32)
    temb = jax.random.normal(kt, (B, temb_dim), jnp.float32)
    cond = jax.random.normal(kc, (B, cond_ch, H, W), jnp.float32)

    mod = ResnetBlockDDPMppSPADEPallas(
        in_ch=in_ch, out_ch=out_ch, cond_ch=cond_ch, temb_dim=temb_dim,
        spade_dim=spade_dim, skip_rescale=True, compute_dtype=jnp.float32, key=kp)

    out = jax.block_until_ready(mod(x, temb, cond))
    ref = jax.block_until_ready(reference_forward(mod, x, temb, cond))

    assert out.shape == (B, out_ch, H, W)
    max_err = float(jnp.max(jnp.abs(out - ref)))
    assert jnp.allclose(out, ref, atol=2e-3, rtol=2e-3), f"max abs err = {max_err}"

    print("KERNEL_OK")
</pallas_src>

<mosaic_0001>
module attributes {stable_mosaic.version = 11 : i64} {
  func.func @conv3x3_kernel(%arg0: i32, %arg1: i32, %arg2: memref<1x16x256xf32, #tpu.memory_space<vmem>>, %arg3: memref<64x144xf32, #tpu.memory_space<vmem>>, %arg4: memref<1x64x1xf32, #tpu.memory_space<vmem>>, %arg5: memref<1x64x256xf32, #tpu.memory_space<vmem>>, %arg6: memref<144x256xf32, #tpu.memory_space<vmem>>) attributes {dimension_semantics = [#tpu.dimension_semantics<parallel>, #tpu.dimension_semantics<arbitrary>], iteration_bounds = array<i64: 2, 1>, scalar_prefetch = 0 : i64, scratch_operands = 1 : i64, tpu.core_type = #tpu.core_type<tc>, window_params = [{transform_indices = @transform_0, window_bounds = array<i64: 1, 16, 256>}, {transform_indices = @transform_1, window_bounds = array<i64: 64, 144>}, {transform_indices = @transform_2, window_bounds = array<i64: 1, 64, 1>}, {transform_indices = @transform_3, window_bounds = array<i64: 1, 64, 256>}]} {
    %c0_i32 = arith.constant 0 : i32
    %0 = arith.cmpi eq, %arg1, %c0_i32 : i32
    %1 = arith.extui %0 : i1 to i32
    %c0_i32_0 = arith.constant 0 : i32
    %2 = arith.cmpi ne, %1, %c0_i32_0 : i32
    scf.if %2 {
      %c0_11 = arith.constant 0 : index
      %c0_12 = arith.constant 0 : index
      %c0_13 = arith.constant 0 : index
      %19 = vector.load %arg2[%c0_11, %c0_12, %c0_13] : memref<1x16x256xf32, #tpu.memory_space<vmem>>, vector<1x16x256xf32>
      %20 = vector.shape_cast %19 : vector<1x16x256xf32> to vector<16x256xf32>
      %21 = tpu.iota {dimensions = array<i32: 1>} : vector<1x256xi32>
      %c15_i32 = arith.constant 15 : i32
      %22 = vector.broadcast %c15_i32 : i32 to vector<1x256xi32>
      %23 = arith.andi %21, %22 : vector<1x256xi32>
      %c16_i32 = arith.constant 16 : i32
      %24 = vector.broadcast %c16_i32 : i32 to vector<1x256xi32>
      %25 = arith.cmpi sge, %21, %24 : vector<1x256xi32>
      %c240_i32 = arith.constant 240 : i32
      %26 = vector.broadcast %c240_i32 : i32 to vector<1x256xi32>
      %27 = arith.cmpi slt, %21, %26 : vector<1x256xi32>
      %c1_i32 = arith.constant 1 : i32
      %28 = vector.broadcast %c1_i32 : i32 to vector<1x256xi32>
      %29 = arith.cmpi sge, %23, %28 : vector<1x256xi32>
      %c14_i32 = arith.constant 14 : i32
      %30 = vector.broadcast %c14_i32 : i32 to vector<1x256xi32>
      %31 = arith.cmpi sle, %23, %30 : vector<1x256xi32>
      %32 = vector.extract_strided_slice %20 {offsets = [0, 240], sizes = [16, 16], strides = [1, 1]} : vector<16x256xf32> to vector<16x16xf32>
      %33 = vector.extract_strided_slice %20 {offsets = [0, 0], sizes = [16, 240], strides = [1, 1]} : vector<16x256xf32> to vector<16x240xf32>
      %34 = tpu.concatenate %32, %33 in 1 : vector<16x16xf32>, vector<16x240xf32> -> vector<16x256xf32>
      %c0_i32_14 = arith.constant 0 : i32
      %35 = arith.sitofp %c0_i32_14 : i32 to f32
      %36 = vector.shape_cast %25 : vector<1x256xi1> to vector<1x256xi1>
      %37 = vector.broadcast %36 : vector<1x256xi1> to vector<16x256xi1>
      %38 = vector.broadcast %35 : f32 to vector<16x256xf32>
      %39 = arith.select %37, %34, %38 : vector<16x256xi1>, vector<16x256xf32>
      %40 = vector.extract_strided_slice %39 {offsets = [0, 255], sizes = [16, 1], strides = [1, 1]} : vector<16x256xf32> to vector<16x1xf32>
      %41 = vector.extract_strided_slice %39 {offsets = [0, 0], sizes = [16, 255], strides = [1, 1]} : vector<16x256xf32> to vector<16x255xf32>
      %42 = tpu.concatenate %40, %41 in 1 : vector<16x1xf32>, vector<16x255xf32> -> vector<16x256xf32>
      %c0_i32_15 = arith.constant 0 : i32
      %43 = arith.sitofp %c0_i32_15 : i32 to f32
      %44 = vector.shape_cast %29 : vector<1x256xi1> to vector<1x256xi1>
      %45 = vector.broadcast %44 : vector<1x256xi1> to vector<16x256xi1>
      %46 = vector.broadcast %43 : f32 to vector<16x256xf32>
      %47 = arith.select %45, %42, %46 : vector<16x256xi1>, vector<16x256xf32>
      %48 = vector.extract_strided_slice %39 {offsets = [0, 1], sizes = [16, 255], strides = [1, 1]} : vector<16x256xf32> to vector<16x255xf32>
      %49 = vector.extract_strided_slice %39 {offsets = [0, 0], sizes = [16, 1], strides = [1, 1]} : vector<16x256xf32> to vector<16x1xf32>
      %50 = tpu.concatenate %48, %49 in 1 : vector<16x255xf32>, vector<16x1xf32> -> vector<16x256xf32>
      %c0_i32_16 = arith.constant 0 : i32
      %51 = arith.sitofp %c0_i32_16 : i32 to f32
      %52 = vector.shape_cast %31 : vector<1x256xi1> to vector<1x256xi1>
      %53 = vector.broadcast %52 : vector<1x256xi1> to vector<16x256xi1>
      %54 = vector.broadcast %51 : f32 to vector<16x256xf32>
      %55 = arith.select %53, %50, %54 : vector<16x256xi1>, vector<16x256xf32>
      %56 = vector.extract_strided_slice %20 {offsets = [0, 255], sizes = [16, 1], strides = [1, 1]} : vector<16x256xf32> to vector<16x1xf32>
      %57 = vector.extract_strided_slice %20 {offsets = [0, 0], sizes = [16, 255], strides = [1, 1]} : vector<16x256xf32> to vector<16x255xf32>
      %58 = tpu.concatenate %56, %57 in 1 : vector<16x1xf32>, vector<16x255xf32> -> vector<16x256xf32>
      %c0_i32_17 = arith.constant 0 : i32
      %59 = arith.sitofp %c0_i32_17 : i32 to f32
      %60 = vector.shape_cast %29 : vector<1x256xi1> to vector<1x256xi1>
      %61 = vector.broadcast %60 : vector<1x256xi1> to vector<16x256xi1>
      %62 = vector.broadcast %59 : f32 to vector<16x256xf32>
      %63 = arith.select %61, %58, %62 : vector<16x256xi1>, vector<16x256xf32>
      %64 = vector.extract_strided_slice %20 {offsets = [0, 1], sizes = [16, 255], strides = [1, 1]} : vector<16x256xf32> to vector<16x255xf32>
      %65 = vector.extract_strided_slice %20 {offsets = [0, 0], sizes = [16, 1], strides = [1, 1]} : vector<16x256xf32> to vector<16x1xf32>
      %66 = tpu.concatenate %64, %65 in 1 : vector<16x255xf32>, vector<16x1xf32> -> vector<16x256xf32>
      %c0_i32_18 = arith.constant 0 : i32
      %67 = arith.sitofp %c0_i32_18 : i32 to f32
      %68 = vector.shape_cast %31 : vector<1x256xi1> to vector<1x256xi1>
      %69 = vector.broadcast %68 : vector<1x256xi1> to vector<16x256xi1>
      %70 = vector.broadcast %67 : f32 to vector<16x256xf32>
      %71 = arith.select %69, %66, %70 : vector<16x256xi1>, vector<16x256xf32>
      %72 = vector.extract_strided_slice %20 {offsets = [0, 16], sizes = [16, 240], strides = [1, 1]} : vector<16x256xf32> to vector<16x240xf32>
      %73 = vector.extract_strided_slice %20 {offsets = [0, 0], sizes = [16, 16], strides = [1, 1]} : vector<16x256xf32> to vector<16x16xf32>
      %74 = tpu.concatenate %72, %73 in 1 : vector<16x240xf32>, vector<16x16xf32> -> vector<16x256xf32>
      %c0_i32_19 = arith.constant 0 : i32
      %75 = arith.sitofp %c0_i32_19 : i32 to f32
      %76 = vector.shape_cast %27 : vector<1x256xi1> to vector<1x256xi1>
      %77 = vector.broadcast %76 : vector<1x256xi1> to vector<16x256xi1>
      %78 = vector.broadcast %75 : f32 to vector<16x256xf32>
      %79 = arith.select %77, %74, %78 : vector<16x256xi1>, vector<16x256xf32>
      %80 = vector.extract_strided_slice %79 {offsets = [0, 255], sizes = [16, 1], strides = [1, 1]} : vector<16x256xf32> to vector<16x1xf32>
      %81 = vector.extract_strided_slice %79 {offsets = [0, 0], sizes = [16, 255], strides = [1, 1]} : vector<16x256xf32> to vector<16x255xf32>
      %82 = tpu.concatenate %80, %81 in 1 : vector<16x1xf32>, vector<16x255xf32> -> vector<16x256xf32>
      %c0_i32_20 = arith.constant 0 : i32
      %83 = arith.sitofp %c0_i32_20 : i32 to f32
      %84 = vector.shape_cast %29 : vector<1x256xi1> to vector<1x256xi1>
      %85 = vector.broadcast %84 : vector<1x256xi1> to vector<16x256xi1>
      %86 = vector.broadcast %83 : f32 to vector<16x256xf32>
      %87 = arith.select %85, %82, %86 : vector<16x256xi1>, vector<16x256xf32>
      %88 = vector.extract_strided_slice %79 {offsets = [0, 1], sizes = [16, 255], strides = [1, 1]} : vector<16x256xf32> to vector<16x255xf32>
      %89 = vector.extract_strided_slice %79 {offsets = [0, 0], sizes = [16, 1], strides = [1, 1]} : vector<16x256xf32> to vector<16x1xf32>
      %90 = tpu.concatenate %88, %89 in 1 : vector<16x255xf32>, vector<16x1xf32> -> vector<16x256xf32>
      %c0_i32_21 = arith.constant 0 : i32
      %91 = arith.sitofp %c0_i32_21 : i32 to f32
      %92 = vector.shape_cast %31 : vector<1x256xi1> to vector<1x256xi1>
      %93 = vector.broadcast %92 : vector<1x256xi1> to vector<16x256xi1>
      %94 = vector.broadcast %91 : f32 to vector<16x256xf32>
      %95 = arith.select %93, %90, %94 : vector<16x256xi1>, vector<16x256xf32>
      %96 = tpu.concatenate %47, %39, %55, %63, %20, %71, %87, %79, %95 in 0 : vector<16x256xf32>, vector<16x256xf32>, vector<16x256xf32>, vector<16x256xf32>, vector<16x256xf32>, vector<16x256xf32>, vector<16x256xf32>, vector<16x256xf32>, vector<16x256xf32> -> vector<144x256xf32>
      %c0_22 = arith.constant 0 : index
      %c0_23 = arith.constant 0 : index
      %97 = vector.load %arg6[%c0_22, %c0_23] : memref<144x256xf32, #tpu.memory_space<vmem>>, vector<144x256xf32>
      tpu.vector_store %arg6[%c0_22, %c0_23], %96 {strides = array<i32>} : memref<144x256xf32, #tpu.memory_space<vmem>>, vector<144x256xf32>,
    } else {
    }
    %c0 = arith.constant 0 : index
    %c0_1 = arith.constant 0 : index
    %3 = vector.load %arg3[%c0, %c0_1] : memref<64x144xf32, #tpu.memory_space<vmem>>, vector<64x144xf32>
    %c0_2 = arith.constant 0 : index
    %c0_3 = arith.constant 0 : index
    %4 = vector.load %arg6[%c0_2, %c0_3] : memref<144x256xf32, #tpu.memory_space<vmem>>, vector<144x256xf32>
    %cst = arith.constant dense<0.000000e+00> : vector<64x256xf32>
    %5 = tpu.matmul %3, %4, %cst {dimension_numbers = #tpu.dot_dimension_numbers<[1], [0], [0], [1], [0, 0, 1, 1], [], []>} : vector<64x144xf32>, vector<144x256xf32>, vector<64x256xf32> -> vector<64x256xf32>
    %c0_4 = arith.constant 0 : index
    %c0_5 = arith.constant 0 : index
    %c0_6 = arith.constant 0 : index
    %6 = vector.load %arg4[%c0_4, %c0_5, %c0_6] : memref<1x64x1xf32, #tpu.memory_space<vmem>>, vector<1x64x1xf32>
    %7 = vector.shape_cast %6 : vector<1x64x1xf32> to vector<64x1xf32>
    %8 = vector.broadcast %7 : vector<64x1xf32> to vector<64x256xf32>
    %9 = arith.addf %5, %8 : vector<64x256xf32>
    %10 = arith.negf %9 : vector<64x256xf32>
    %11 = math.exp %10 : vector<64x256xf32>
    %cst_7 = arith.constant 1.000000e+00 : f32
    %12 = vector.broadcast %cst_7 : f32 to vector<64x256xf32>
    %13 = arith.addf %12, %11 : vector<64x256xf32>
    %14 = arith.divf %12, %13 : vector<64x256xf32>
    %15 = arith.mulf %9, %14 : vector<64x256xf32>
    %c0_8 = arith.constant 0 : index
    %c0_9 = arith.constant 0 : index
    %c0_10 = arith.constant 0 : index
    %16 = vector.load %arg5[%c0_8, %c0_9, %c0_10] : memref<1x64x256xf32, #tpu.memory_space<vmem>>, vector<1x64x256xf32>
    %17 = vector.shape_cast %16 : vector<1x64x256xf32> to vector<64x256xf32>
    %18 = vector.shape_cast %15 : vector<64x256xf32> to vector<1x64x256xf32>
    tpu.vector_store %arg5[%c0_8, %c0_9, %c0_10], %18 {strides = array<i32>} : memref<1x64x256xf32, #tpu.memory_space<vmem>>, vector<1x64x256xf32>,
    return
  }
  func.func @transform_0(%arg0: i32, %arg1: i32) -> (i32, i32, i32) {
    %c0_i32 = arith.constant 0 : i32
    %c0_i32_0 = arith.constant 0 : i32
    %c0_i32_1 = arith.constant 0 : i32
    return %arg0, %c0_i32, %c0_i32_0 : i32, i32, i32
  }
  func.func @transform_1(%arg0: i32, %arg1: i32) -> (i32, i32) {
    %c0_i32 = arith.constant 0 : i32
    %c0_i32_0 = arith.constant 0 : i32
    return %arg1, %c0_i32 : i32, i32
  }
  func.func @transform_2(%arg0: i32, %arg1: i32) -> (i32, i32, i32) {
    %c0_i32 = arith.constant 0 : i32
    %c0_i32_0 = arith.constant 0 : i32
    return %arg0, %arg1, %c0_i32 : i32, i32, i32
  }
  func.func @transform_3(%arg0: i32, %arg1: i32) -> (i32, i32, i32) {
    %c0_i32 = arith.constant 0 : i32
    %c0_i32_0 = arith.constant 0 : i32
    return %arg0, %arg1, %c0_i32 : i32, i32, i32
  }
}

</mosaic_0001>

<llo_original>
// kernel: tpu_custom_call.1
$region0: #{tpu_custom_call.1}
  #allocation0 [shape = 'u32[]', space=smem, size = 0x4, offset = 0x4, fixed_abs, tag = 'smem constant byte address 0x4 - core index']
  #allocation1 [shape = 'u32[144,128]{1,0:T(1,128)}', space=vmem, size = 0x12000, scoped, tag = 'internal scratch']
  #allocation2 [shape = 'f32[144,256]{1,0:T(8,128)}', space=vmem, size = 0x24000, scoped, tag = 'scratch operand']
  %s0 = inlined_call_operand.hbm [shape: f32[2,16,256], index: 0, kind: input, shape index: {}]
  %s1 = inlined_call_operand.vmem [shape: f32[64,144], index: 1, kind: input, shape index: {}]
  %s2 = inlined_call_operand.vmem [shape: f32[2,64,1], index: 2, kind: input, shape index: {}]
  %s3 = inlined_call_operand.hbm [shape: f32[2,64,256], index: 3, kind: output, shape index: {}]
  %s4 = sld [smem:[#allocation0]]
  $region53: #{tpu_custom_call.1} parent=0
    _
  %s6 = ssub.s32 1, %s4
  %s7 = scalar_select 0, %s6, %s4
  $region1: #{tpu_custom_call.1} parent=0
    #allocation3 [shape = 'u8[32768]{0}', space=vmem, size = 0x8000, scoped, tag = 'input window, operand 0']
    #allocation4 [shape = 's32[2]{0}', space=sflag, size = 0x8, scoped, tag = 'scoped memory for tpu_custom_call.1']
    #allocation5 [shape = 's32[2]{0}', space=sflag, size = 0x8, scoped, tag = 'scoped memory for tpu_custom_call.1']
    #allocation6 [shape = 'u8[131072]{0}', space=vmem, size = 0x20000, scoped, tag = 'output window, operand 0']
    %8 = vsyncpa [#allocation4], 0
    %s9 = scalar_lea.sflag [#allocation4], 1
    %10 = vsyncpa %s9, 0
    %11 = vsyncpa [#allocation5], 0
    %s12 = scalar_lea.sflag [#allocation5], 1
    %13 = vsyncpa %s12, 0
    loop: start=0, step=1, limit=4
    $region2: #{tpu_custom_call.1} parent=1 // loop_pre_header
      _
    $region3: #{tpu_custom_call.1} parent=1 // loop_header
      %s15 = sphi 0, %s19
      %p16 = scmp.ge.s32.totalorder %s15, 4
      %s22 = sphi 0, %s34
      %s23 = sphi 0, %s30
      %s24 = sphi 0, %s22
      %s25 = sphi 0, %s23
      %s26 = sphi 0, %s24
      %s27 = sphi 0, %s25
      %s37 = sphi 0, %s39
      %s40 = sphi 0, %s37
      %s41 = sphi 0, %s40
      %s57 = sphi 0, %s41
      %s63 = sphi 0, %s65
      %s66 = sphi 0, %s63
      %s67 = sphi 0, %s66
      %s83 = sphi 0, %s67
      %s91 = sphi 0, %s93
      %s94 = sphi 0, %s91
      %s95 = sphi 0, %s94
      %s111 = sphi 0, %s95
      %s119 = sphi 0, %s121
      %s122 = sphi 0, %s119
      %s123 = sphi 0, %s122
      %s139 = sphi 0, %s123
    $region4: #{tpu_custom_call.1} parent=1 // loop_header_branch
      %18 = sbr.rel (%p16) target = $region8
    $region5: #{tpu_custom_call.1} parent=1 // loop_body
      %s20 = ssub.s32 %s15, 1
      %s21 = ssub.s32 %s15, 2
      %s28 = sadd.s32 1, %s23
      %p29 = scmp.ge.s32.totalorder %s28, 1
      %s30 = scalar_select %p29, 0, %s28
      %s31 = sadd.s32 1, %s22
      %s32 = scalar_select %p29, %s31, %s22
      %p33 = scmp.ge.s32.totalorder %s32, 2
      %s34 = scalar_select %p33, 0, %s32
      %s35 = ssub.s32 %s22, %s34
      %p36 = scmp.eq.s32.totalorder %s35, 0
      %s38 = sadd.s32 %s37, 1
      %s39 = scalar_select %p36, %s37, %s38
      %p42 = pneg %p36
      %p43 = scmp.eq.s32.totalorder %s15, 1
      %p44 = por %p42, %p43
      %p45 = scmp.ne.s32.totalorder %s37, %s40
      %p46 = scmp.eq.s32.totalorder %s15, 0
      %p47 = por %p45, %p46
      %p48 = scmp.ne.s32.totalorder %s37, %s40
      %p49 = scmp.eq.s32.totalorder %s20, 1
      %p50 = por %p48, %p49
      %p51 = scmp.ne.s32.totalorder %s40, %s41
      %p52 = scmp.eq.s32.totalorder %s20, 0
      %p53 = por %p51, %p52
      %p54 = scmp.ne.s32.totalorder %s40, %s41
      %p55 = scmp.eq.s32.totalorder %s21, 1
      %p56 = por %p54, %p55
      %p58 = scmp.ne.s32.totalorder %s41, %s57
      %p59 = scmp.eq.s32.totalorder %s21, 0
      %p60 = por %p58, %p59
      %s61 = ssub.s32 %s23, %s30
      %p62 = scmp.eq.s32.totalorder %s61, 0
      %s64 = sadd.s32 %s63, 1
      %s65 = scalar_select %p62, %s63, %s64
      %p68 = pneg %p62
      %p69 = scmp.eq.s32.totalorder %s15, 1
      %p70 = por %p68, %p69
      %p71 = scmp.ne.s32.totalorder %s63, %s66
      %p72 = scmp.eq.s32.totalorder %s15, 0
      %p73 = por %p71, %p72
      %p74 = scmp.ne.s32.totalorder %s63, %s66
      %p75 = scmp.eq.s32.totalorder %s20, 1
      %p76 = por %p74, %p75
      %p77 = scmp.ne.s32.totalorder %s66, %s67
      %p78 = scmp.eq.s32.totalorder %s20, 0
      %p79 = por %p77, %p78
      %p80 = scmp.ne.s32.totalorder %s66, %s67
      %p81 = scmp.eq.s32.totalorder %s21, 1
      %p82 = por %p80, %p81
      %p84 = scmp.ne.s32.totalorder %s67, %s83
      %p85 = scmp.eq.s32.totalorder %s21, 0
      %p86 = por %p84, %p85
      %s87 = ssub.s32 %s22, %s34
      %s88 = ssub.s32 %s23, %s30
      %s89 = sor.u32 %s87, %s88
      %p90 = scmp.eq.s32.totalorder %s89, 0
      %s92 = sadd.s32 %s91, 1
      %s93 = scalar_select %p90, %s91, %s92
      %p96 = pneg %p90
      %p97 = scmp.eq.s32.totalorder %s15, 1
      %p98 = por %p96, %p97
      %p99 = scmp.ne.s32.totalorder %s91, %s94
      %p100 = scmp.eq.s32.totalorder %s15, 0
      %p101 = por %p99, %p100
      %p102 = scmp.ne.s32.totalorder %s91, %s94
      %p103 = scmp.eq.s32.totalorder %s20, 1
      %p104 = por %p102, %p103
      %p105 = scmp.ne.s32.totalorder %s94, %s95
      %p106 = scmp.eq.s32.totalorder %s20, 0
      %p107 = por %p105, %p106
      %p108 = scmp.ne.s32.totalorder %s94, %s95
      %p109 = scmp.eq.s32.totalorder %s21, 1
      %p110 = por %p108, %p109
      %p112 = scmp.ne.s32.totalorder %s95, %s111
      %p113 = scmp.eq.s32.totalorder %s21, 0
      %p114 = por %p112, %p113
      %s115 = ssub.s32 %s22, %s34
      %s116 = ssub.s32 %s23, %s30
      %s117 = sor.u32 %s115, %s116
      %p118 = scmp.eq.s32.totalorder %s117, 0
      %s120 = sadd.s32 %s119, 1
      %s121 = scalar_select %p118, %s119, %s120
      %p124 = pneg %p118
      %p125 = scmp.eq.s32.totalorder %s15, 1
      %p126 = por %p124, %p125
      %p127 = scmp.ne.s32.totalorder %s119, %s122
      %p128 = scmp.eq.s32.totalorder %s15, 0
      %p129 = por %p127, %p128
      %p130 = scmp.ne.s32.totalorder %s119, %s122
      %p131 = scmp.eq.s32.totalorder %s20, 1
      %p132 = por %p130, %p131
      %p133 = scmp.ne.s32.totalorder %s122, %s123
      %p134 = scmp.eq.s32.totalorder %s20, 0
      %p135 = por %p133, %p134
      %p136 = scmp.ne.s32.totalorder %s122, %s123
      %p137 = scmp.eq.s32.totalorder %s21, 1
      %p138 = por %p136, %p137
      %p140 = scmp.ne.s32.totalorder %s123, %s139
      %p141 = scmp.eq.s32.totalorder %s21, 0
      %p142 = por %p140, %p141
      %p143 = scmp.le.s32.totalorder 1, %s15
      %p144 = scmp.lt.s32.totalorder %s15, 3
      %p145 = pnand %p143, %p144
      %p146 = pneg %p145
      // Predicated region
      $region9: #{tpu_custom_call.1} parent=5 // pred_check
        _
      $region10: #{tpu_custom_call.1} parent=5 // pred_check_branch
        %148 = sbr.rel (%p145) target = $region12
      $region11: #{tpu_custom_call.1} parent=5 // pred_region
        %s149 = ssub.s32 %s15, 1
        // Predicated region
        $region13: #{tpu_custom_call.1} parent=11 // pred_check
          %p150 = pneg %p79
        $region14: #{tpu_custom_call.1} parent=11 // pred_check_branch
          %152 = sbr.rel (%p150) target = $region16
        $region15: #{tpu_custom_call.1} parent=11 // pred_region
          %s153 = smul.u32 8, %s25
          %p154 = scmp.lt.s32.totalorder %s153, 7
          %s155 = scalar_select %p154, %s153, 7
          %s156 = smul.addr %s155, 2
          %s157 = smul.addr %s156, 8
          %s158 = scalar_lea.vmem %s1, %s157
          %s159 = smul.u32 8, %s25
        $region16: #{tpu_custom_call.1} parent=11 // pred_fallthru
          _
      $region12: #{tpu_custom_call.1} parent=5 // pred_fallthru
        _
      %p160 = scmp.lt.s32.totalorder %s15, 2
      // Predicated region
      $region17: #{tpu_custom_call.1} parent=5 // pred_check
        %p161 = pneg %p160
      $region18: #{tpu_custom_call.1} parent=5 // pred_check_branch
        %163 = sbr.rel (%p161) target = $region20
      $region19: #{tpu_custom_call.1} parent=5 // pred_region
        // Predicated region
        $region21: #{tpu_custom_call.1} parent=19 // pred_check
          %p164 = pneg %p47
        $region22: #{tpu_custom_call.1} parent=19 // pred_check_branch
          %166 = sbr.rel (%p164) target = $region24
        $region23: #{tpu_custom_call.1} parent=19 // pred_region
          %s167 = sand.u32 %s37, 1
          %s168 = scalar_lea.sflag [#allocation4], %s167
          %s169 = sand.u32 %s37, 1
          %s170 = smul.addr %s169, 32
          %s171 = scalar_lea.vmem [#allocation3], %s170
          %s173 = ssub.s32 512, 512
          %174 = vsyncadd %s168, %s173
          %s175 = smul.addr %s22, 4
          %s176 = smul.addr %s175, 128
          %s177 = scalar_lea.hbm %s0, %s176
          %s178 = sshll.u32 %s171, 4
          %s179 = int_to_ptr.vmem [resolvable:$true] %s178
          %184 = dma.hbm_to_vmem [thread:$0]  %s177, 512, %s179, %s168, 256, 256, 16
        $region24: #{tpu_custom_call.1} parent=19 // pred_fallthru
          _
        // Predicated region
        $region25: #{tpu_custom_call.1} parent=19 // pred_check
          %p185 = pneg %p101
        $region26: #{tpu_custom_call.1} parent=19 // pred_check_branch
          %187 = sbr.rel (%p185) target = $region28
        $region27: #{tpu_custom_call.1} parent=19 // pred_region
          %s188 = smul.u32 8, %s23
          %p189 = scmp.lt.s32.totalorder %s22, 1
          %s190 = scalar_select %p189, %s22, 1
          %p191 = scmp.lt.s32.totalorder %s188, 7
          %s192 = scalar_select %p191, %s188, 7
          %s193 = smul.addr %s190, 8
          %s194 = sadd.s32 %s192, %s193
          %s195 = smul.addr %s194, 8
          %s196 = scalar_lea.vmem %s2, %s195
          %s197 = smul.u32 8, %s23
        $region28: #{tpu_custom_call.1} parent=19 // pred_fallthru
          _
      $region20: #{tpu_custom_call.1} parent=5 // pred_fallthru
        _
      %p198 = scmp.le.s32.totalorder 1, %s15
      %p199 = scmp.lt.s32.totalorder %s15, 3
      %p200 = pnand %p198, %p199
      %p201 = pneg %p200
      // Predicated region
      $region29: #{tpu_custom_call.1} parent=5 // pred_check
        _
      $region30: #{tpu_custom_call.1} parent=5 // pred_check_branch
        %203 = sbr.rel (%p200) target = $region32
      $region31: #{tpu_custom_call.1} parent=5 // pred_region
        %s204 = ssub.s32 %s15, 1
        %s205 = sand.u32 %s40, 1
        %s206 = scalar_lea.sflag [#allocation4], %s205
        %s207 = sand.u32 %s40, 1
        %s208 = smul.addr %s207, 32
        %s209 = scalar_lea.vmem [#allocation3], %s208
        // Predicated region
        $region33: #{tpu_custom_call.1} parent=31 // pred_check
          %p210 = pneg %p53
        $region34: #{tpu_custom_call.1} parent=31 // pred_check_branch
          %212 = sbr.rel (%p210) target = $region36
        $region35: #{tpu_custom_call.1} parent=31 // pred_region
          %213 = dma.done %s206, 512
        $region36: #{tpu_custom_call.1} parent=31 // pred_fallthru
          _
        %s214 = sand.u32 %s40, 1
        %s215 = scalar_lea.sflag [#allocation4], %s214
        %s216 = sand.u32 %s40, 1
        %s217 = smul.addr %s216, 32
        %s218 = scalar_lea.vmem [#allocation3], %s217
        %p219 = pneg %p53
        %p220 = pneg %p50
        %s221 = smul.u32 8, %s25
        %p222 = scmp.lt.s32.totalorder %s221, 7
        %s223 = scalar_select %p222, %s221, 7
        %s224 = smul.addr %s223, 2
        %s225 = smul.addr %s224, 8
        %s226 = scalar_lea.vmem %s1, %s225
        %p227 = pneg %p79
        %p228 = pneg %p76
        %s229 = smul.u32 8, %s25
        %p230 = scmp.lt.s32.totalorder %s24, 1
        %s231 = scalar_select %p230, %s24, 1
        %p232 = scmp.lt.s32.totalorder %s229, 7
        %s233 = scalar_select %p232, %s229, 7
        %s234 = smul.addr %s231, 8
        %s235 = sadd.s32 %s233, %s234
        %s236 = smul.addr %s235, 8
        %s237 = scalar_lea.vmem %s2, %s236
        %p238 = pneg %p107
        %p239 = pneg %p104
        %p240 = pneg %p135
        %p241 = pneg %p132
        %s242 = sand.u32 %s122, 1
        %s243 = scalar_lea.sflag [#allocation5], %s242
        %s244 = sand.u32 %s122, 1
        %s245 = smul.addr %s244, 128
        %s246 = scalar_lea.vmem [#allocation6], %s245
        %s247 = smul.u32 8, %s25
        %p248 = scmp.lt.s32.totalorder %s247, 7
        %s249 = scalar_select %p248, %s247, 7
        %s250 = smul.addr %s249, 2
        %s251 = smul.addr %s250, 8
        %s252 = scalar_lea.vmem %s1, %s251
        %s253 = smul.u32 8, %s25
        %s254 = smul.u32 8, %s25
        %p255 = scmp.lt.s32.totalorder %s24, 1
        %s256 = scalar_select %p255, %s24, 1
        %p257 = scmp.lt.s32.totalorder %s254, 7
        %s258 = scalar_select %p257, %s254, 7
        %s259 = smul.addr %s256, 8
        %s260 = sadd.s32 %s258, %s259
        %s261 = smul.addr %s260, 8
        %s262 = scalar_lea.vmem %s2, %s261
        %s263 = smul.u32 8, %s25
        %s264 = smul.u32 8, %s25
        %p265 = scmp.eq.s32.totalorder %s25, 0
        // Predicated region
        $region37: #{tpu_custom_call.1} parent=31 // pred_check
          %p266 = pneg %p265
        $region38: #{tpu_custom_call.1} parent=31 // pred_check_branch
          %268 = sbr.rel (%p266) target = $region40
        $region39: #{tpu_custom_call.1} parent=31 // pred_region
          %v269 = vld [vmem:[%s209] sm:$0xff]
          %v270 = vld [vmem:[%s209 + $0x8] sm:$0xff]
          %v271 = vld [vmem:[%s209 + $0x10] sm:$0xff]
          %v272 = vld [vmem:[%s209 + $0x18] sm:$0xff]
          %v273 = vlaneseq
          %v274 = vand.u32 %v273, 127
          %v275 = vadd.s32 %v274, 128
          %v276 = vand.u32 %v274, 15
          %v277 = vand.u32 %v275, 15
          %vm278 = vcmp.ge.s32.totalorder %v274, 16
          %vm279 = vcmp.ge.s32.totalorder %v275, 16
          %vm280 = vcmp.lt.s32.totalorder %v274, 240
          %vm281 = vcmp.lt.s32.totalorder %v275, 240
          %vm282 = vcmp.ge.s32.totalorder %v276, 1
          %vm283 = vcmp.ge.s32.totalorder %v277, 1
          %vm284 = vcmp.le.s32.totalorder %v276, 14
          %vm285 = vcmp.le.s32.totalorder %v277, 14
          %288 = vrot.lane.b32.xlu0 %v270, 16
          %v289 = vpop.permute.xlu0 %288
          %290 = vrot.lane.b32.xlu0 %v272, 16
          %v291 = vpop.permute.xlu0 %290
          %296 = vrot.lane.b32.xlu0 %v269, 16
          %v297 = vpop.permute.xlu0 %296
          %298 = vrot.lane.b32.xlu0 %v271, 16
          %v299 = vpop.permute.xlu0 %298
          %vm300 = vcmask 130048
          %v301 = vsel %vm300, %v297, %v289
          %v302 = vsel %vm300, %v299, %v291
          %v307 = vsel %vm300, %v289, %v297
          %v308 = vsel %vm300, %v291, %v299
          %v309 = vsel %vm278, 1, 0
          %v310 = vsel %vm279, 1, 0
          %vm311 = vcmp.eq.s32.totalorder %v309, 1
          %vm312 = vcmp.eq.s32.totalorder %v310, 1
          %v313 = vsel %vm311, %v307, 0.0
          %v314 = vsel %vm312, %v301, 0.0
          %v315 = vsel %vm311, %v308, 0.0
          %v316 = vsel %vm312, %v302, 0.0
          %319 = vrot.lane.b32.xlu0 %v314, 1
          %v320 = vpop.permute.xlu0 %319
          %321 = vrot.lane.b32.xlu0 %v316, 1
          %v322 = vpop.permute.xlu0 %321
          %327 = vrot.lane.b32.xlu0 %v313, 1
          %v328 = vpop.permute.xlu0 %327
          %329 = vrot.lane.b32.xlu0 %v315, 1
          %v330 = vpop.permute.xlu0 %329
          %vm331 = vcmask 7168
          %v332 = vsel %vm331, %v328, %v320
          %v333 = vsel %vm331, %v330, %v322
          %v338 = vsel %vm331, %v320, %v328
          %v339 = vsel %vm331, %v322, %v330
          %v340 = vsel %vm282, 1, 0
          %v341 = vsel %vm283, 1, 0
          %vm342 = vcmp.eq.s32.totalorder %v340, 1
          %vm343 = vcmp.eq.s32.totalorder %v341, 1
          %v344 = vsel %vm342, %v338, 0.0
          %v345 = vsel %vm343, %v332, 0.0
          %v346 = vsel %vm342, %v339, 0.0
          %v347 = vsel %vm343, %v333, 0.0
          %348 = vrot.lane.b32.xlu0 %v313, 127
          %v349 = vpop.permute.xlu0 %348
          %350 = vrot.lane.b32.xlu0 %v314, 127
          %v351 = vpop.permute.xlu0 %350
          %352 = vrot.lane.b32.xlu0 %v315, 127
          %v353 = vpop.permute.xlu0 %352
          %354 = vrot.lane.b32.xlu0 %v316, 127
          %v355 = vpop.permute.xlu0 %354
          %vm356 = vcmask 1039360
          %v357 = vsel %vm356, %v349, %v351
          %v358 = vsel %vm356, %v353, %v355
          %v365 = vsel %vm356, %v351, %v349
          %v366 = vsel %vm356, %v355, %v353
          %v367 = vsel %vm284, 1, 0
          %v368 = vsel %vm285, 1, 0
          %vm369 = vcmp.eq.s32.totalorder %v367, 1
          %vm370 = vcmp.eq.s32.totalorder %v368, 1
          %v371 = vsel %vm369, %v357, 0.0
          %v372 = vsel %vm370, %v365, 0.0
          %v373 = vsel %vm369, %v358, 0.0
          %v374 = vsel %vm370, %v366, 0.0
          %375 = vrot.lane.b32.xlu0 %v270, 1
          %v376 = vpop.permute.xlu0 %375
          %377 = vrot.lane.b32.xlu0 %v272, 1
          %v378 = vpop.permute.xlu0 %377
          %381 = vrot.lane.b32.xlu0 %v269, 1
          %v382 = vpop.permute.xlu0 %381
          %383 = vrot.lane.b32.xlu0 %v271, 1
          %v384 = vpop.permute.xlu0 %383
          %v385 = vsel %vm331, %v382, %v376
          %v386 = vsel %vm331, %v384, %v378
          %v391 = vsel %vm331, %v376, %v382
          %v392 = vsel %vm331, %v378, %v384
          %v393 = vsel %vm342, %v391, 0.0
          %v394 = vsel %vm343, %v385, 0.0
          %v395 = vsel %vm342, %v392, 0.0
          %v396 = vsel %vm343, %v386, 0.0
          %397 = vrot.lane.b32.xlu0 %v269, 127
          %v398 = vpop.permute.xlu0 %397
          %399 = vrot.lane.b32.xlu0 %v270, 127
          %v400 = vpop.permute.xlu0 %399
          %401 = vrot.lane.b32.xlu0 %v271, 127
          %v402 = vpop.permute.xlu0 %401
          %403 = vrot.lane.b32.xlu0 %v272, 127
          %v404 = vpop.permute.xlu0 %403
          %v405 = vsel %vm356, %v398, %v400
          %v406 = vsel %vm356, %v402, %v404
          %v413 = vsel %vm356, %v400, %v398
          %v414 = vsel %vm356, %v404, %v402
          %v415 = vsel %vm369, %v405, 0.0
          %v416 = vsel %vm370, %v413, 0.0
          %v417 = vsel %vm369, %v406, 0.0
          %v418 = vsel %vm370, %v414, 0.0
          %419 = vrot.lane.b32.xlu0 %v269, 112
          %v420 = vpop.permute.xlu0 %419
          %421 = vrot.lane.b32.xlu0 %v270, 112
          %v422 = vpop.permute.xlu0 %421
          %423 = vrot.lane.b32.xlu0 %v271, 112
          %v424 = vpop.permute.xlu0 %423
          %425 = vrot.lane.b32.xlu0 %v272, 112
          %v426 = vpop.permute.xlu0 %425
          %vm427 = vcmask 916480
          %v428 = vsel %vm427, %v420, %v422
          %v429 = vsel %vm427, %v424, %v426
          %v436 = vsel %vm427, %v422, %v420
          %v437 = vsel %vm427, %v426, %v424
          %v438 = vsel %vm280, 1, 0
          %v439 = vsel %vm281, 1, 0
          %vm440 = vcmp.eq.s32.totalorder %v438, 1
          %vm441 = vcmp.eq.s32.totalorder %v439, 1
          %v442 = vsel %vm440, %v428, 0.0
          %v443 = vsel %vm441, %v436, 0.0
          %v444 = vsel %vm440, %v429, 0.0
          %v445 = vsel %vm441, %v437, 0.0
          %448 = vrot.lane.b32.xlu0 %v443, 1
          %v449 = vpop.permute.xlu0 %448
          %450 = vrot.lane.b32.xlu0 %v445, 1
          %v451 = vpop.permute.xlu0 %450
          %456 = vrot.lane.b32.xlu0 %v442, 1
          %v457 = vpop.permute.xlu0 %456
          %458 = vrot.lane.b32.xlu0 %v444, 1
          %v459 = vpop.permute.xlu0 %458
          %v460 = vsel %vm331, %v457, %v449
          %v461 = vsel %vm331, %v459, %v451
          %v466 = vsel %vm331, %v449, %v457
          %v467 = vsel %vm331, %v451, %v459
          %v468 = vsel %vm342, %v466, 0.0
          %v469 = vsel %vm343, %v460, 0.0
          %v470 = vsel %vm342, %v467, 0.0
          %v471 = vsel %vm343, %v461, 0.0
          %472 = vrot.lane.b32.xlu0 %v442, 127
          %v473 = vpop.permute.xlu0 %472
          %474 = vrot.lane.b32.xlu0 %v443, 127
          %v475 = vpop.permute.xlu0 %474
          %476 = vrot.lane.b32.xlu0 %v444, 127
          %v477 = vpop.permute.xlu0 %476
          %478 = vrot.lane.b32.xlu0 %v445, 127
          %v479 = vpop.permute.xlu0 %478
          %v480 = vsel %vm356, %v473, %v475
          %v481 = vsel %vm356, %v477, %v479
          %v488 = vsel %vm356, %v475, %v473
          %v489 = vsel %vm356, %v479, %v477
          %v490 = vsel %vm369, %v480, 0.0
          %v491 = vsel %vm370, %v488, 0.0
          %v492 = vsel %vm369, %v481, 0.0
          %v493 = vsel %vm370, %v489, 0.0
          %494 = vst [vmem:[#allocation2] sm:$0xff] %v344
          %495 = vst [vmem:[#allocation2 + $0x8] sm:$0xff] %v345
          %496 = vst [vmem:[#allocation2 + $0x10] sm:$0xff] %v346
          %497 = vst [vmem:[#allocation2 + $0x18] sm:$0xff] %v347
          %498 = vst [vmem:[#allocation2 + $0x20] sm:$0xff] %v313
          %499 = vst [vmem:[#allocation2 + $0x28] sm:$0xff] %v314
          %500 = vst [vmem:[#allocation2 + $0x30] sm:$0xff] %v315
          %501 = vst [vmem:[#allocation2 + $0x38] sm:$0xff] %v316
          %502 = vst [vmem:[#allocation2 + $0x40] sm:$0xff] %v371
          %503 = vst [vmem:[#allocation2 + $0x48] sm:$0xff] %v372
          %504 = vst [vmem:[#allocation2 + $0x50] sm:$0xff] %v373
          %505 = vst [vmem:[#allocation2 + $0x58] sm:$0xff] %v374
          %506 = vst [vmem:[#allocation2 + $0x60] sm:$0xff] %v393
          %507 = vst [vmem:[#allocation2 + $0x68] sm:$0xff] %v394
          %508 = vst [vmem:[#allocation2 + $0x70] sm:$0xff] %v395
          %509 = vst [vmem:[#allocation2 + $0x78] sm:$0xff] %v396
          %510 = vst [vmem:[#allocation2 + $0x80] sm:$0xff] %v269
          %511 = vst [vmem:[#allocation2 + $0x88] sm:$0xff] %v270
          %512 = vst [vmem:[#allocation2 + $0x90] sm:$0xff] %v271
          %513 = vst [vmem:[#allocation2 + $0x98] sm:$0xff] %v272
          %514 = vst [vmem:[#allocation2 + $0xa0] sm:$0xff] %v415
          %515 = vst [vmem:[#allocation2 + $0xa8] sm:$0xff] %v416
          %516 = vst [vmem:[#allocation2 + $0xb0] sm:$0xff] %v417
          %517 = vst [vmem:[#allocation2 + $0xb8] sm:$0xff] %v418
          %518 = vst [vmem:[#allocation2 + $0xc0] sm:$0xff] %v468
          %519 = vst [vmem:[#allocation2 + $0xc8] sm:$0xff] %v469
          %520 = vst [vmem:[#allocation2 + $0xd0] sm:$0xff] %v470
          %521 = vst [vmem:[#allocation2 + $0xd8] sm:$0xff] %v471
          %522 = vst [vmem:[#allocation2 + $0xe0] sm:$0xff] %v442
          %523 = vst [vmem:[#allocation2 + $0xe8] sm:$0xff] %v443
          %524 = vst [vmem:[#allocation2 + $0xf0] sm:$0xff] %v444
          %525 = vst [vmem:[#allocation2 + $0xf8] sm:$0xff] %v445
          %526 = vst [vmem:[#allocation2 + $0x100] sm:$0xff] %v490
          %527 = vst [vmem:[#allocation2 + $0x108] sm:$0xff] %v491
          %528 = vst [vmem:[#allocation2 + $0x110] sm:$0xff] %v492
          %529 = vst [vmem:[#allocation2 + $0x118] sm:$0xff] %v493
        $region40: #{tpu_custom_call.1} parent=31 // pred_fallthru
          _
        %v530 = vld [vmem:[%s252] sm:$0xff]
        %v531 = vld [vmem:[%s252 + $0x8] sm:$0xff]
        %v532 = vld [vmem:[%s252 + $0x10] sm:$0xff]
        %v533 = vld [vmem:[%s252 + $0x18] sm:$0xff]
        %v534 = vld [vmem:[%s252 + $0x20] sm:$0xff]
        %v535 = vld [vmem:[%s252 + $0x28] sm:$0xff]
        %v536 = vld [vmem:[%s252 + $0x30] sm:$0xff]
        %v537 = vld [vmem:[%s252 + $0x38] sm:$0xff]
        %v538 = vld [vmem:[%s252 + $0x40] sm:$0xff]
        %v539 = vld [vmem:[%s252 + $0x48] sm:$0xff]
        %v540 = vld [vmem:[%s252 + $0x50] sm:$0xff]
        %v541 = vld [vmem:[%s252 + $0x58] sm:$0xff]
        %v542 = vld [vmem:[%s252 + $0x60] sm:$0xff]
        %v543 = vld [vmem:[%s252 + $0x68] sm:$0xff]
        %v544 = vld [vmem:[%s252 + $0x70] sm:$0xff]
        %v545 = vld [vmem:[%s252 + $0x78] sm:$0xff]
        %v546 = vld [vmem:[#allocation2] sm:$0xff]
        %v547 = vld [vmem:[#allocation2 + $0x8] sm:$0xff]
        %v548 = vld [vmem:[#allocation2 + $0x10] sm:$0xff]
        %v549 = vld [vmem:[#allocation2 + $0x18] sm:$0xff]
        %v550 = vld [vmem:[#allocation2 + $0x20] sm:$0xff]
        %v551 = vld [vmem:[#allocation2 + $0x28] sm:$0xff]
        %v552 = vld [vmem:[#allocation2 + $0x30] sm:$0xff]
        %v553 = vld [vmem:[#allocation2 + $0x38] sm:$0xff]
        %v554 = vld [vmem:[#allocation2 + $0x40] sm:$0xff]
        %v555 = vld [vmem:[#allocation2 + $0x48] sm:$0xff]
        %v556 = vld [vmem:[#allocation2 + $0x50] sm:$0xff]
        %v557 = vld [vmem:[#allocation2 + $0x58] sm:$0xff]
        %v558 = vld [vmem:[#allocation2 + $0x60] sm:$0xff]
        %v559 = vld [vmem:[#allocation2 + $0x68] sm:$0xff]
        %v560 = vld [vmem:[#allocation2 + $0x70] sm:$0xff]
        %v561 = vld [vmem:[#allocation2 + $0x78] sm:$0xff]
        %v562 = vld [vmem:[#allocation2 + $0x80] sm:$0xff]
        %v563 = vld [vmem:[#allocation2 + $0x88] sm:$0xff]
        %v564 = vld [vmem:[#allocation2 + $0x90] sm:$0xff]
        %v565 = vld [vmem:[#allocation2 + $0x98] sm:$0xff]
        %v566 = vld [vmem:[#allocation2 + $0xa0] sm:$0xff]
        %v567 = vld [vmem:[#allocation2 + $0xa8] sm:$0xff]
        %v568 = vld [vmem:[#allocation2 + $0xb0] sm:$0xff]
        %v569 = vld [vmem:[#allocation2 + $0xb8] sm:$0xff]
        %v570 = vld [vmem:[#allocation2 + $0xc0] sm:$0xff]
        %v571 = vld [vmem:[#allocation2 + $0xc8] sm:$0xff]
        %v572 = vld [vmem:[#allocation2 + $0xd0] sm:$0xff]
        %v573 = vld [vmem:[#allocation2 + $0xd8] sm:$0xff]
        %v574 = vld [vmem:[#allocation2 + $0xe0] sm:$0xff]
        %v575 = vld [vmem:[#allocation2 + $0xe8] sm:$0xff]
        %v576 = vld [vmem:[#allocation2 + $0xf0] sm:$0xff]
        %v577 = vld [vmem:[#allocation2 + $0xf8] sm:$0xff]
        %v578 = vld [vmem:[#allocation2 + $0x100] sm:$0xff]
        %v579 = vld [vmem:[#allocation2 + $0x108] sm:$0xff]
        %v580 = vld [vmem:[#allocation2 + $0x110] sm:$0xff]
        %v581 = vld [vmem:[#allocation2 + $0x118] sm:$0xff]
        %v582 = vld [vmem:[%s262] sm:$0xff]
        %v583 = vld [vmem:[%s262 + $0x8] sm:$0xff]
        %v584 = vld [vmem:[%s262 + $0x10] sm:$0xff]
        %v585 = vld [vmem:[%s262 + $0x18] sm:$0xff]
        %v586 = vld [vmem:[%s262 + $0x20] sm:$0xff]
        %v587 = vld [vmem:[%s262 + $0x28] sm:$0xff]
        %v588 = vld [vmem:[%s262 + $0x30] sm:$0xff]
        %v589 = vld [vmem:[%s262 + $0x38] sm:$0xff]
        %591 = vset.pattern.permute.xlu0 0
        %592 = vperm.xlu0 %591, %v582
        %v593 = vpop.permute.xlu0 %592
        %596 = vset.pattern.permute.xlu0 0
        %597 = vperm.xlu0 %596, %v583
        %v598 = vpop.permute.xlu0 %597
        %601 = vset.pattern.permute.xlu0 0
        %602 = vperm.xlu0 %601, %v584
        %v603 = vpop.permute.xlu0 %602
        %606 = vset.pattern.permute.xlu0 0
        %607 = vperm.xlu0 %606, %v585
        %v608 = vpop.permute.xlu0 %607
        %611 = vset.pattern.permute.xlu0 0
        %612 = vperm.xlu0 %611, %v586
        %v613 = vpop.permute.xlu0 %612
        %616 = vset.pattern.permute.xlu0 0
        %617 = vperm.xlu0 %616, %v587
        %v618 = vpop.permute.xlu0 %617
        %621 = vset.pattern.permute.xlu0 0
        %622 = vperm.xlu0 %621, %v588
        %v623 = vpop.permute.xlu0 %622
        %626 = vset.pattern.permute.xlu0 0
        %627 = vperm.xlu0 %626, %v589
        %v628 = vpop.permute.xlu0 %627
        %vm630 = vcmask 130048
        %v632 = vsel %vm630, %v531, 0
        %v635 = vsel %vm630, %v533, 0
        %v638 = vsel %vm630, %v535, 0
        %v641 = vsel %vm630, %v537, 0
        %v644 = vsel %vm630, %v539, 0
        %v647 = vsel %vm630, %v541, 0
        %v650 = vsel %vm630, %v543, 0
        %v653 = vsel %vm630, %v545, 0
        %655 = vmatprep.subr.mxu0 %v577
        %656 = vmatpush1.msra.mxu0 %v576
        %657 = vmatprep.subr.mxu0 %v575
        %658 = vmatpush1.msra.mxu0 %v574
        %659 = vmatprep.subr.mxu0 %v573
        %660 = vmatpush1.msra.mxu0 %v572
        %661 = vmatprep.subr.mxu0 %v571
        %662 = vmatpush1.msra.mxu0 %v570
        %663 = vmatprep.subr.mxu0 %v569
        %664 = vmatpush1.msra.mxu0 %v568
        %665 = vmatprep.subr.mxu0 %v567
        %666 = vmatpush1.msra.mxu0 %v566
        %667 = vmatprep.subr.mxu0 %v565
        %668 = vmatpush1.msra.mxu0 %v564
        %669 = vmatprep.subr.mxu0 %v563
        %670 = vmatpush1.msra.mxu0 %v562
        %671 = vmatprep.subr.mxu0 %v561
        %672 = vmatpush1.msra.mxu0 %v560
        %673 = vmatprep.subr.mxu0 %v559
        %674 = vmatpush1.msra.mxu0 %v558
        %675 = vmatprep.subr.mxu0 %v557
        %676 = vmatpush1.msra.mxu0 %v556
        %677 = vmatprep.subr.mxu0 %v555
        %678 = vmatpush1.msra.mxu0 %v554
        %679 = vmatprep.subr.mxu0 %v553
        %680 = vmatpush1.msra.mxu0 %v552
        %681 = vmatprep.subr.mxu0 %v551
        %682 = vmatpush1.msra.mxu0 %v550
        %683 = vmatprep.subr.mxu0 %v549
        %684 = vmatpush1.msra.mxu0 %v548
        %685 = vmatprep.subr.mxu0 %v547
        %686 = vmatpush1.msra.mxu0 %v546
        %687 = vmatprep.subr.mxu0 0.0
        %688 = vmatpush2.msra.mxu0 0.0
        %689 = vmatprep.subr.mxu0 0.0
        %690 = vmatpush2.msra.mxu0 0.0
        %691 = vmatprep.subr.mxu0 0.0
        %692 = vmatpush2.msra.mxu0 0.0
        %693 = vmatprep.subr.mxu0 0.0
        %694 = vmatpush2.msra.mxu0 0.0
        %695 = vmatprep.subr.mxu0 0.0
        %696 = vmatpush2.msra.mxu0 0.0
        %697 = vmatprep.subr.mxu0 0.0
        %698 = vmatpush2.msra.mxu0 0.0
        %699 = vmatprep.subr.mxu0 0.0
        %700 = vmatpush2.msra.mxu0 0.0
        %701 = vmatprep.subr.mxu0 0.0
        %702 = vmatpush2.msra.mxu0 0.0
        %703 = vmatprep.subr.mxu0 0.0
        %704 = vmatpush2.msra.mxu0 0.0
        %705 = vmatprep.subr.mxu0 0.0
        %706 = vmatpush2.msra.mxu0 0.0
        %707 = vmatprep.subr.mxu0 0.0
        %708 = vmatpush2.msra.mxu0 0.0
        %709 = vmatprep.subr.mxu0 0.0
        %710 = vmatpush2.msra.mxu0 0.0
        %711 = vmatprep.subr.mxu0 0.0
        %712 = vmatpush2.msra.mxu0 0.0
        %713 = vmatprep.subr.mxu0 0.0
        %714 = vmatpush2.msra.mxu0 0.0
        %715 = vmatprep.subr.mxu0 %v581
        %716 = vmatpush2.msra.mxu0 %v580
        %717 = vmatprep.subr.mxu0 %v579
        %718 = vmatpush2.msra.mxu0 %v578
        %719 = vmatprep.mubr.f32.mxu0 %v632
        %720 = vmatmul.mubr.f32.gmra.mxu0 %v530
        %v721 = vpop.f32.mrf.mxu0
        %v722 = vadd.f32 %v593, %v721
        %v723 = vpop.f32.mrf.mxu0
        %v724 = vadd.f32 %v593, %v723
        %725 = vmatprep.mubr.f32.mxu0 %v635
        %726 = vmatmul.mubr.f32.gmra.mxu0 %v532
        %v727 = vpop.f32.mrf.mxu0
        %v728 = vadd.f32 %v598, %v727
        %v729 = vpop.f32.mrf.mxu0
        %v730 = vadd.f32 %v598, %v729
        %731 = vmatprep.mubr.f32.mxu0 %v638
        %732 = vmatmul.mubr.f32.gmra.mxu0 %v534
        %v733 = vpop.f32.mrf.mxu0
        %v734 = vadd.f32 %v603, %v733
        %v735 = vpop.f32.mrf.mxu0
        %v736 = vadd.f32 %v603, %v735
        %737 = vmatprep.mubr.f32.mxu0 %v641
        %738 = vmatmul.mubr.f32.gmra.mxu0 %v536
        %v739 = vpop.f32.mrf.mxu0
        %v740 = vadd.f32 %v608, %v739
        %v741 = vpop.f32.mrf.mxu0
        %v742 = vadd.f32 %v608, %v741
        %743 = vmatprep.mubr.f32.mxu0 %v644
        %744 = vmatmul.mubr.f32.gmra.mxu0 %v538
        %v745 = vpop.f32.mrf.mxu0
        %v746 = vadd.f32 %v613, %v745
        %v747 = vpop.f32.mrf.mxu0
        %v748 = vadd.f32 %v613, %v747
        %749 = vmatprep.mubr.f32.mxu0 %v647
        %750 = vmatmul.mubr.f32.gmra.mxu0 %v540
        %v751 = vpop.f32.mrf.mxu0
        %v752 = vadd.f32 %v618, %v751
        %v753 = vpop.f32.mrf.mxu0
        %v754 = vadd.f32 %v618, %v753
        %755 = vmatprep.mubr.f32.mxu0 %v650
        %756 = vmatmul.mubr.f32.gmra.mxu0 %v542
        %v757 = vpop.f32.mrf.mxu0
        %v758 = vadd.f32 %v623, %v757
        %v759 = vpop.f32.mrf.mxu0
        %v760 = vadd.f32 %v623, %v759
        %761 = vmatprep.mubr.f32.mxu0 %v653
        %762 = vmatmul.mubr.f32.gmra.mxu0 %v544
        %v763 = vpop.f32.mrf.mxu0
        %v764 = vadd.f32 %v628, %v763
        %v765 = vpop.f32.mrf.mxu0
        %v766 = vadd.f32 %v628, %v765
        %767 = vdwg.mxu0
        %v768 = vxor.u32 %v722, 2147483648
        %v769 = vxor.u32 %v724, 2147483648
        %v770 = vxor.u32 %v728, 2147483648
        %v771 = vxor.u32 %v730, 2147483648
        %v772 = vxor.u32 %v734, 2147483648
        %v773 = vxor.u32 %v736, 2147483648
        %v774 = vxor.u32 %v740, 2147483648
        %v775 = vxor.u32 %v742, 2147483648
        %v776 = vxor.u32 %v746, 2147483648
        %v777 = vxor.u32 %v748, 2147483648
        %v778 = vxor.u32 %v752, 2147483648
        %v779 = vxor.u32 %v754, 2147483648
        %v780 = vxor.u32 %v758, 2147483648
        %v781 = vxor.u32 %v760, 2147483648
        %v782 = vxor.u32 %v764, 2147483648
        %v783 = vxor.u32 %v766, 2147483648
        %v784 = vmul.f32 %v768, 1.442695
        %v785 = vpow.pop %v784
        %v786 = vmul.f32 %v769, 1.442695
        %v787 = vpow.pop %v786
        %v788 = vmul.f32 %v770, 1.442695
        %v789 = vpow.pop %v788
        %v790 = vmul.f32 %v771, 1.442695
        %v791 = vpow.pop %v790
        %v792 = vmul.f32 %v772, 1.442695
        %v793 = vpow.pop %v792
        %v794 = vmul.f32 %v773, 1.442695
        %v795 = vpow.pop %v794
        %v796 = vmul.f32 %v774, 1.442695
        %v797 = vpow.pop %v796
        %v798 = vmul.f32 %v775, 1.442695
        %v799 = vpow.pop %v798
        %v800 = vmul.f32 %v776, 1.442695
        %v801 = vpow.pop %v800
        %v802 = vmul.f32 %v777, 1.442695
        %v803 = vpow.pop %v802
        %v804 = vmul.f32 %v778, 1.442695
        %v805 = vpow.pop %v804
        %v806 = vmul.f32 %v779, 1.442695
        %v807 = vpow.pop %v806
        %v808 = vmul.f32 %v780, 1.442695
        %v809 = vpow.pop %v808
        %v810 = vmul.f32 %v781, 1.442695
        %v811 = vpow.pop %v810
        %v812 = vmul.f32 %v782, 1.442695
        %v813 = vpow.pop %v812
        %v814 = vmul.f32 %v783, 1.442695
        %v815 = vpow.pop %v814
        %v816 = vadd.f32 %v785, 1.0
        %v817 = vadd.f32 %v787, 1.0
        %v818 = vadd.f32 %v789, 1.0
        %v819 = vadd.f32 %v791, 1.0
        %v820 = vadd.f32 %v793, 1.0
        %v821 = vadd.f32 %v795, 1.0
        %v822 = vadd.f32 %v797, 1.0
        %v823 = vadd.f32 %v799, 1.0
        %v824 = vadd.f32 %v801, 1.0
        %v825 = vadd.f32 %v803, 1.0
        %v826 = vadd.f32 %v805, 1.0
        %v827 = vadd.f32 %v807, 1.0
        %v828 = vadd.f32 %v809, 1.0
        %v829 = vadd.f32 %v811, 1.0
        %v830 = vadd.f32 %v813, 1.0
        %v831 = vadd.f32 %v815, 1.0
        %v832 = vrcp.pop %v816
        %v833 = vmul.f32 1.0, %v832
        %v834 = vrcp.pop %v817
        %v835 = vmul.f32 1.0, %v834
        %v836 = vrcp.pop %v818
        %v837 = vmul.f32 1.0, %v836
        %v838 = vrcp.pop %v819
        %v839 = vmul.f32 1.0, %v838
        %v840 = vrcp.pop %v820
        %v841 = vmul.f32 1.0, %v840
        %v842 = vrcp.pop %v821
        %v843 = vmul.f32 1.0, %v842
        %v844 = vrcp.pop %v822
        %v845 = vmul.f32 1.0, %v844
        %v846 = vrcp.pop %v823
        %v847 = vmul.f32 1.0, %v846
        %v848 = vrcp.pop %v824
        %v849 = vmul.f32 1.0, %v848
        %v850 = vrcp.pop %v825
        %v851 = vmul.f32 1.0, %v850
        %v852 = vrcp.pop %v826
        %v853 = vmul.f32 1.0, %v852
        %v854 = vrcp.pop %v827
        %v855 = vmul.f32 1.0, %v854
        %v856 = vrcp.pop %v828
        %v857 = vmul.f32 1.0, %v856
        %v858 = vrcp.pop %v829
        %v859 = vmul.f32 1.0, %v858
        %v860 = vrcp.pop %v830
        %v861 = vmul.f32 1.0, %v860
        %v862 = vrcp.pop %v831
        %v863 = vmul.f32 1.0, %v862
        %v864 = vmul.f32 %v722, %v833
        %v865 = vmul.f32 %v724, %v835
        %v866 = vmul.f32 %v728, %v837
        %v867 = vmul.f32 %v730, %v839
        %v868 = vmul.f32 %v734, %v841
        %v869 = vmul.f32 %v736, %v843
        %v870 = vmul.f32 %v740, %v845
        %v871 = vmul.f32 %v742, %v847
        %v872 = vmul.f32 %v746, %v849
        %v873 = vmul.f32 %v748, %v851
        %v874 = vmul.f32 %v752, %v853
        %v875 = vmul.f32 %v754, %v855
        %v876 = vmul.f32 %v758, %v857
        %v877 = vmul.f32 %v760, %v859
        %v878 = vmul.f32 %v764, %v861
        %v879 = vmul.f32 %v766, %v863
        %880 = vst [vmem:[%s246] sm:$0xff] %v864
        %881 = vst [vmem:[%s246 + $0x8] sm:$0xff] %v865
        %882 = vst [vmem:[%s246 + $0x10] sm:$0xff] %v866
        %883 = vst [vmem:[%s246 + $0x18] sm:$0xff] %v867
        %884 = vst [vmem:[%s246 + $0x20] sm:$0xff] %v868
        %885 = vst [vmem:[%s246 + $0x28] sm:$0xff] %v869
        %886 = vst [vmem:[%s246 + $0x30] sm:$0xff] %v870
        %887 = vst [vmem:[%s246 + $0x38] sm:$0xff] %v871
        %888 = vst [vmem:[%s246 + $0x40] sm:$0xff] %v872
        %889 = vst [vmem:[%s246 + $0x48] sm:$0xff] %v873
        %890 = vst [vmem:[%s246 + $0x50] sm:$0xff] %v874
        %891 = vst [vmem:[%s246 + $0x58] sm:$0xff] %v875
        %892 = vst [vmem:[%s246 + $0x60] sm:$0xff] %v876
        %893 = vst [vmem:[%s246 + $0x68] sm:$0xff] %v877
        %894 = vst [vmem:[%s246 + $0x70] sm:$0xff] %v878
        %895 = vst [vmem:[%s246 + $0x78] sm:$0xff] %v879
        %s896 = sand.u32 %s122, 1
        %s897 = scalar_lea.sflag [#allocation5], %s896
        %s898 = sand.u32 %s122, 1
        %s899 = smul.addr %s898, 128
        %s900 = scalar_lea.vmem [#allocation6], %s899
        // Predicated region
        $region41: #{tpu_custom_call.1} parent=31 // pred_check
          %p901 = pneg %p132
        $region42: #{tpu_custom_call.1} parent=31 // pred_check_branch
          %903 = sbr.rel (%p901) target = $region44
        $region43: #{tpu_custom_call.1} parent=31 // pred_region
          %s904 = smul.u32 8, %s25
          %s906 = ssub.s32 2048, 2048
          %907 = vsyncadd %s897, %s906
          %s908 = smul.addr %s904, 2
          %s909 = smul.addr %s24, 16
          %s910 = sadd.s32 %s908, %s909
          %s911 = smul.addr %s910, 128
          %s912 = scalar_lea.hbm %s3, %s911
          %s913 = sshll.u32 %s900, 4
          %s914 = int_to_ptr.vmem [resolvable:$true] %s913
          %919 = dma.vmem_to_hbm [thread:$0]  %s914, 2048, %s912, %s897, 256, 256, 16
        $region44: #{tpu_custom_call.1} parent=31 // pred_fallthru
          _
      $region32: #{tpu_custom_call.1} parent=5 // pred_fallthru
        _
      %p920 = scmp.le.s32.totalorder 2, %s15
      // Predicated region
      $region45: #{tpu_custom_call.1} parent=5 // pred_check
        %p921 = pneg %p920
      $region46: #{tpu_custom_call.1} parent=5 // pred_check_branch
        %923 = sbr.rel (%p921) target = $region48
      $region47: #{tpu_custom_call.1} parent=5 // pred_region
        %s924 = ssub.s32 %s15, 2
        // Predicated region
        $region49: #{tpu_custom_call.1} parent=47 // pred_check
          %p925 = pneg %p138
        $region50: #{tpu_custom_call.1} parent=47 // pred_check_branch
          %927 = sbr.rel (%p925) target = $region52
        $region51: #{tpu_custom_call.1} parent=47 // pred_region
          %s928 = sand.u32 %s123, 1
          %s929 = scalar_lea.sflag [#allocation5], %s928
          %s930 = sand.u32 %s123, 1
          %s931 = smul.addr %s930, 128
          %s932 = scalar_lea.vmem [#allocation6], %s931
          %933 = dma.done %s929, 2048
        $region52: #{tpu_custom_call.1} parent=47 // pred_fallthru
          _
      $region48: #{tpu_custom_call.1} parent=5 // pred_fallthru
        _
    $region6: #{tpu_custom_call.1} parent=1 // loop_footer
      %s19 = sadd.s32 1, %s15
    $region7: #{tpu_custom_call.1} parent=1 // loop_footer_branch
      %14 = sbr.rel target = $region3
    $region8: #{tpu_custom_call.1} parent=1 // loop_exit
      _
    %934 = vsyncpa [#allocation4], 1
    %s935 = scalar_lea.sflag [#allocation4], 1
    %936 = vsyncpa %s935, 1
    %937 = vsyncpa [#allocation5], 1
    %s938 = scalar_lea.sflag [#allocation5], 1
    %939 = vsyncpa %s938, 1

</llo_original>
